<compile_context>
chip_gen: v7x
topology: tpu7x:2x2x1
jax: 0.10.0
libtpu: 0.0.40
codegen_flags: <defaults>
</compile_context>

<pallas_src>
import functools

import jax
import jax.numpy as jnp
import numpy as np
from jax.experimental import pallas as pl
from jax.experimental.pallas import tpu as pltpu


def _cdiv(a, b):
    return (a + b - 1) // b


def _round_up(a, b):
    return _cdiv(a, b) * b


def _focal_ce_kernel(x_ref, t_ref, sum_ref, cnt_ref, *, num_classes):
    """Masked cross-entropy partial sums for one (batch, spatial-tile) block.

    x_ref:   (1, C, ts) logits (native layout, spatial on lanes).
    t_ref:   (1, 1, ts) int32 targets (value == num_classes means 'ignore').
    sum_ref: (1, 1, ts) f32 lane-wide CE partial sums (resident across tiles).
    cnt_ref: (1, 1, ts) f32 lane-wide valid-pixel counts.
    """
    i = pl.program_id(1)  # spatial-tile (reduction) axis

    @pl.when(i == 0)
    def _():
        sum_ref[...] = jnp.zeros_like(sum_ref)
        cnt_ref[...] = jnp.zeros_like(cnt_ref)

    x = x_ref[...].astype(jnp.float32)          # (1, C, ts)
    t = t_ref[...]                              # (1, 1, ts) int32

    # Numerically-stable log-softmax denominator.  Reductions run over the
    # small C sublane axis only; lanes stay fully dense.
    m = jnp.max(x, axis=1, keepdims=True)                            # (1, 1, ts)
    lse = m + jnp.log(jnp.sum(jnp.exp(x - m), axis=1, keepdims=True))

    # Gather the target logit via one-hot compare/select (no dynamic gather
    # on TPU; C is small so this is cheap VPU work).
    cls = jax.lax.broadcasted_iota(jnp.int32, x.shape, 1)            # (1, C, ts)
    tgt_logit = jnp.sum(jnp.where(cls == t, x, 0.0), axis=1, keepdims=True)

    logpt = lse - tgt_logit                     # per-pixel -log p_target

    valid = t != num_classes                    # ignore_index == num_classes
    sum_ref[...] += jnp.where(valid, logpt, 0.0)
    cnt_ref[...] += valid.astype(jnp.float32)


def focal_loss(inputs, targets, *, num_classes, gamma=2.0, alpha=None,
               reduction="mean", target_tile_bytes=4 << 20):
    """inputs: (N, C, H, W) float logits (f32 or bf16); targets: (N, H, W)
    int class ids (value == num_classes means 'ignore')."""
    if alpha is not None:
        # TODO(synk): the reference alpha branch (alpha.gather(0, targets) with
        # multi-dim targets on a 1-D alpha) errors in PyTorch; alpha=None only.
        raise NotImplementedError("alpha weighting not supported")

    n, c, h, w = inputs.shape
    hw = h * w

    # Free reshapes only — NO transpose / HBM copy of the logits.
    x3 = inputs.reshape(n, c, hw)                       # (N, C, HW)
    t3 = targets.reshape(n, 1, hw).astype(jnp.int32)    # (N, 1, HW)

    # Choose the spatial (lane) tile: ~target_tile_bytes of logits per tile,
    # multiple of 128, minimal spatial padding.
    x_bytes = np.dtype(inputs.dtype).itemsize
    hw128 = _round_up(hw, 128)
    ts_cap = max(128, (target_tile_bytes // (c * x_bytes)) // 128 * 128)
    n_sp = max(1, _cdiv(hw128, ts_cap))
    ts = _round_up(_cdiv(hw128, n_sp), 128)
    hw_pad = n_sp * ts

    if hw_pad != hw:
        # Zero-padded logits are harmless: padded targets == num_classes, so
        # their (finite) CE is masked out of both partial sums.
        x3 = jnp.pad(x3, ((0, 0), (0, 0), (0, hw_pad - hw)))
        t3 = jnp.pad(t3, ((0, 0), (0, 0), (0, hw_pad - hw)),
                     constant_values=num_classes)

    # Double-buffered working set: logits tile + targets tile + 2 outputs.
    vmem_needed = 2 * (c * ts * x_bytes + ts * 4 + 2 * ts * 4)
    vmem_limit = int(min(max(vmem_needed * 5 // 4 + (2 << 20), 16 << 20),
                         40 << 20))

    kernel = functools.partial(_focal_ce_kernel, num_classes=num_classes)

    sum_out, cnt_out = pl.pallas_call(
        kernel,
        out_shape=(jax.ShapeDtypeStruct((n, 1, ts), jnp.float32),
                   jax.ShapeDtypeStruct((n, 1, ts), jnp.float32)),
        grid_spec=pltpu.PrefetchScalarGridSpec(
            num_scalar_prefetch=0,
            grid=(n, n_sp),
            in_specs=[
                pl.BlockSpec((1, c, ts), lambda b, i: (b, 0, i)),
                pl.BlockSpec((1, 1, ts), lambda b, i: (b, 0, i)),
            ],
            out_specs=(
                pl.BlockSpec((1, 1, ts), lambda b, i: (b, 0, 0)),
                pl.BlockSpec((1, 1, ts), lambda b, i: (b, 0, 0)),
            ),
        ),
        compiler_params=pltpu.CompilerParams(
            dimension_semantics=("parallel", "arbitrary"),
            vmem_limit_bytes=vmem_limit),
    )(x3, t3)

    # Legacy reduce='none' -> reduction='mean' in the reference CrossEntropyLoss:
    # logpt is the scalar masked-mean CE.  (If every pixel is ignored, cnt==0
    # and the result is NaN, matching PyTorch's mean-over-empty.)
    sum_ce = jnp.sum(sum_out, dtype=jnp.float32)
    cnt = jnp.sum(cnt_out, dtype=jnp.float32)
    logpt = sum_ce / cnt
    pt = jnp.exp(-logpt)
    focal = (1.0 - pt) ** gamma * logpt

    # focal is already a scalar, so 'mean'/'sum'/'none' all return it unchanged.
    return focal


def _ref_focal_loss(inputs, targets, *, num_classes, gamma=2.0):
    """Pure-JAX reference mirroring the exact PyTorch semantics."""
    c = inputs.shape[1]
    x = jnp.transpose(inputs, (0, 2, 3, 1)).reshape(-1, c).astype(jnp.float32)
    t = targets.reshape(-1)
    lse = jax.scipy.special.logsumexp(x, axis=-1)
    safe_t = jnp.clip(t, 0, num_classes - 1)
    tgt = jnp.take_along_axis(x, safe_t[:, None], axis=-1)[:, 0]
    logpt_per = lse - tgt
    valid = t != num_classes
    logpt = jnp.sum(jnp.where(valid, logpt_per, 0.0)) / jnp.sum(valid)
    pt = jnp.exp(-logpt)
    return (1.0 - pt) ** gamma * logpt


if __name__ == "__main__":
    key = jax.random.PRNGKey(0)
    k_in, k_tgt, k_in2, k_tgt2 = jax.random.split(key, 4)

    # Main case: batch=2, channels=4, spatial=16x16, num_classes = C = 4.
    N, C, H, W = 2, 4, 16, 16
    num_classes = C
    gamma = 2.0

    inputs = jax.random.normal(k_in, (N, C, H, W), dtype=jnp.float32)
    # targets in [0, num_classes]; value == num_classes exercises ignore_index.
    targets = jax.random.randint(k_tgt, (N, H, W), 0, num_classes + 1,
                                 dtype=jnp.int32)

    out = focal_loss(inputs, targets, num_classes=num_classes, gamma=gamma)
    out = jax.block_until_ready(out)
    ref = _ref_focal_loss(inputs, targets, num_classes=num_classes, gamma=gamma)
    assert jnp.allclose(out, ref, rtol=1e-5, atol=1e-6), (out, ref)

    # Secondary case: non-128-aligned spatial extent exercises the pad path.
    N2, C2, H2, W2 = 2, 3, 10, 10
    inputs2 = jax.random.normal(k_in2, (N2, C2, H2, W2), dtype=jnp.float32)
    targets2 = jax.random.randint(k_tgt2, (N2, H2, W2), 0, C2 + 1,
                                  dtype=jnp.int32)
    out2 = jax.block_until_ready(
        focal_loss(inputs2, targets2, num_classes=C2, gamma=gamma))
    ref2 = _ref_focal_loss(inputs2, targets2, num_classes=C2, gamma=gamma)
    assert jnp.allclose(out2, ref2, rtol=1e-5, atol=1e-6), (out2, ref2)

    print("KERNEL_OK")
</pallas_src>

<mosaic_0001>
module attributes {stable_mosaic.version = 11 : i64} {
  func.func @_focal_ce_kernel(%arg0: i32, %arg1: i32, %arg2: memref<1x4x256xf32, #tpu.memory_space<vmem>>, %arg3: memref<1x1x256xi32, #tpu.memory_space<vmem>>, %arg4: memref<1x1x256xf32, #tpu.memory_space<vmem>>, %arg5: memref<1x1x256xf32, #tpu.memory_space<vmem>>) attributes {dimension_semantics = [#tpu.dimension_semantics<parallel>, #tpu.dimension_semantics<arbitrary>], iteration_bounds = array<i64: 2, 1>, scalar_prefetch = 0 : i64, scratch_operands = 0 : i64, tpu.core_type = #tpu.core_type<tc>, window_params = [{transform_indices = @transform_0, window_bounds = array<i64: 1, 4, 256>}, {transform_indices = @transform_1, window_bounds = array<i64: 1, 1, 256>}, {transform_indices = @transform_2, window_bounds = array<i64: 1, 1, 256>}, {transform_indices = @transform_3, window_bounds = array<i64: 1, 1, 256>}]} {
    %c0_i32 = arith.constant 0 : i32
    %0 = arith.cmpi eq, %arg1, %c0_i32 : i32
    %1 = arith.extui %0 : i1 to i32
    %c0_i32_0 = arith.constant 0 : i32
    %2 = arith.cmpi ne, %1, %c0_i32_0 : i32
    scf.if %2 {
      %cst_22 = arith.constant 0.000000e+00 : f32
      %34 = vector.broadcast %cst_22 : f32 to vector<1x1x256xf32>
      %c0_23 = arith.constant 0 : index
      %c0_24 = arith.constant 0 : index
      %c0_25 = arith.constant 0 : index
      %35 = vector.load %arg4[%c0_23, %c0_24, %c0_25] : memref<1x1x256xf32, #tpu.memory_space<vmem>>, vector<1x1x256xf32>
      tpu.vector_store %arg4[%c0_23, %c0_24, %c0_25], %34 {strides = array<i32>} : memref<1x1x256xf32, #tpu.memory_space<vmem>>, vector<1x1x256xf32>,
      %cst_26 = arith.constant 0.000000e+00 : f32
      %36 = vector.broadcast %cst_26 : f32 to vector<1x1x256xf32>
      %c0_27 = arith.constant 0 : index
      %c0_28 = arith.constant 0 : index
      %c0_29 = arith.constant 0 : index
      %37 = vector.load %arg5[%c0_27, %c0_28, %c0_29] : memref<1x1x256xf32, #tpu.memory_space<vmem>>, vector<1x1x256xf32>
      tpu.vector_store %arg5[%c0_27, %c0_28, %c0_29], %36 {strides = array<i32>} : memref<1x1x256xf32, #tpu.memory_space<vmem>>, vector<1x1x256xf32>,
    } else {
    }
    %c0 = arith.constant 0 : index
    %c0_1 = arith.constant 0 : index
    %c0_2 = arith.constant 0 : index
    %3 = vector.load %arg2[%c0, %c0_1, %c0_2] : memref<1x4x256xf32, #tpu.memory_space<vmem>>, vector<1x4x256xf32>
    %c0_3 = arith.constant 0 : index
    %c0_4 = arith.constant 0 : index
    %c0_5 = arith.constant 0 : index
    %4 = vector.load %arg3[%c0_3, %c0_4, %c0_5] : memref<1x1x256xi32, #tpu.memory_space<vmem>>, vector<1x1x256xi32>
    %cst = arith.constant dense<0xFF800000> : vector<1x256xf32>
    %5 = vector.multi_reduction <maximumf>, %3, %cst [1] : vector<1x4x256xf32> to vector<1x256xf32>
    %6 = vector.shape_cast %5 : vector<1x256xf32> to vector<1x1x256xf32>
    %7 = vector.broadcast %6 : vector<1x1x256xf32> to vector<1x4x256xf32>
    %8 = arith.subf %3, %7 : vector<1x4x256xf32>
    %9 = math.exp %8 : vector<1x4x256xf32>
    %cst_6 = arith.constant dense<0.000000e+00> : vector<1x256xf32>
    %10 = vector.multi_reduction <add>, %9, %cst_6 [1] : vector<1x4x256xf32> to vector<1x256xf32>
    %11 = vector.shape_cast %10 : vector<1x256xf32> to vector<1x1x256xf32>
    %12 = math.log %11 : vector<1x1x256xf32>
    %13 = arith.addf %6, %12 : vector<1x1x256xf32>
    %14 = tpu.iota {dimensions = array<i32: 1>} : vector<1x4x256xi32>
    %15 = vector.broadcast %4 : vector<1x1x256xi32> to vector<1x4x256xi32>
    %16 = arith.cmpi eq, %14, %15 : vector<1x4x256xi32>
    %cst_7 = arith.constant 0.000000e+00 : f32
    %17 = vector.broadcast %cst_7 : f32 to vector<1x4x256xf32>
    %18 = arith.select %16, %3, %17 : vector<1x4x256xi1>, vector<1x4x256xf32>
    %cst_8 = arith.constant dense<0.000000e+00> : vector<1x256xf32>
    %19 = vector.multi_reduction <add>, %18, %cst_8 [1] : vector<1x4x256xf32> to vector<1x256xf32>
    %20 = vector.shape_cast %19 : vector<1x256xf32> to vector<1x1x256xf32>
    %21 = arith.subf %13, %20 : vector<1x1x256xf32>
    %c4_i32 = arith.constant 4 : i32
    %22 = vector.broadcast %c4_i32 : i32 to vector<1x1x256xi32>
    %23 = arith.cmpi ne, %4, %22 : vector<1x1x256xi32>
    %c0_9 = arith.constant 0 : index
    %c0_10 = arith.constant 0 : index
    %c0_11 = arith.constant 0 : index
    %24 = vector.load %arg4[%c0_9, %c0_10, %c0_11] : memref<1x1x256xf32, #tpu.memory_space<vmem>>, vector<1x1x256xf32>
    %cst_12 = arith.constant 0.000000e+00 : f32
    %25 = vector.broadcast %cst_12 : f32 to vector<1x1x256xf32>
    %26 = arith.select %23, %21, %25 : vector<1x1x256xi1>, vector<1x1x256xf32>
    %27 = arith.addf %24, %26 : vector<1x1x256xf32>
    %c0_13 = arith.constant 0 : index
    %c0_14 = arith.constant 0 : index
    %c0_15 = arith.constant 0 : index
    %28 = vector.load %arg4[%c0_13, %c0_14, %c0_15] : memref<1x1x256xf32, #tpu.memory_space<vmem>>, vector<1x1x256xf32>
    tpu.vector_store %arg4[%c0_13, %c0_14, %c0_15], %27 {strides = array<i32>} : memref<1x1x256xf32, #tpu.memory_space<vmem>>, vector<1x1x256xf32>,
    %c0_16 = arith.constant 0 : index
    %c0_17 = arith.constant 0 : index
    %c0_18 = arith.constant 0 : index
    %29 = vector.load %arg5[%c0_16, %c0_17, %c0_18] : memref<1x1x256xf32, #tpu.memory_space<vmem>>, vector<1x1x256xf32>
    %30 = arith.extui %23 : vector<1x1x256xi1> to vector<1x1x256xi32>
    %31 = arith.sitofp %30 : vector<1x1x256xi32> to vector<1x1x256xf32>
    %32 = arith.addf %29, %31 : vector<1x1x256xf32>
    %c0_19 = arith.constant 0 : index
    %c0_20 = arith.constant 0 : index
    %c0_21 = arith.constant 0 : index
    %33 = vector.load %arg5[%c0_19, %c0_20, %c0_21] : memref<1x1x256xf32, #tpu.memory_space<vmem>>, vector<1x1x256xf32>
    tpu.vector_store %arg5[%c0_19, %c0_20, %c0_21], %32 {strides = array<i32>} : memref<1x1x256xf32, #tpu.memory_space<vmem>>, vector<1x1x256xf32>,
    return
  }
  func.func @transform_0(%arg0: i32, %arg1: i32) -> (i32, i32, i32) {
    %c0_i32 = arith.constant 0 : i32
    %c0_i32_0 = arith.constant 0 : i32
    return %arg0, %c0_i32, %arg1 : i32, i32, i32
  }
  func.func @transform_1(%arg0: i32, %arg1: i32) -> (i32, i32, i32) {
    %c0_i32 = arith.constant 0 : i32
    %c0_i32_0 = arith.constant 0 : i32
    return %arg0, %c0_i32, %arg1 : i32, i32, i32
  }
  func.func @transform_2(%arg0: i32, %arg1: i32) -> (i32, i32, i32) {
    %c0_i32 = arith.constant 0 : i32
    %c0_i32_0 = arith.constant 0 : i32
    %c0_i32_1 = arith.constant 0 : i32
    return %arg0, %c0_i32, %c0_i32_0 : i32, i32, i32
  }
  func.func @transform_3(%arg0: i32, %arg1: i32) -> (i32, i32, i32) {
    %c0_i32 = arith.constant 0 : i32
    %c0_i32_0 = arith.constant 0 : i32
    %c0_i32_1 = arith.constant 0 : i32
    return %arg0, %c0_i32, %c0_i32_0 : i32, i32, i32
  }
}

</mosaic_0001>

<llo_original>
// kernel: tpu_custom_call.1
$region0: #{tpu_custom_call.1}
  #allocation0 [shape = 'u32[]', space=smem, size = 0x4, offset = 0x4, fixed_abs, tag = 'smem constant byte address 0x4 - core index']
  #allocation1 [shape = 'u32[144,128]{1,0:T(1,128)}', space=vmem, size = 0x12000, scoped, tag = 'internal scratch']
  %s0 = inlined_call_operand.hbm [shape: f32[2,4,256], index: 0, kind: input, shape index: {}]
  %s1 = inlined_call_operand.hbm [shape: s32[2,1,256], index: 1, kind: input, shape index: {}]
  %s2 = inlined_call_operand.hbm [shape: f32[2,1,256], index: 2, kind: output, shape index: {0}]
  %s3 = inlined_call_operand.hbm [shape: f32[2,1,256], index: 3, kind: output, shape index: {1}]
  %4 = xla_tuple %s2, %s3
  %s5 = sld [smem:[#allocation0]]
  $region61: #{tpu_custom_call.1} parent=0
    _
  %s7 = ssub.s32 1, %s5
  %s8 = scalar_select 0, %s7, %s5
  $region1: #{tpu_custom_call.1} parent=0
    #allocation2 [shape = 'u8[8192]{0}', space=vmem, size = 0x2000, scoped, tag = 'input window, operand 0']
    #allocation3 [shape = 's32[2]{0}', space=sflag, size = 0x8, scoped, tag = 'scoped memory for tpu_custom_call.1']
    #allocation4 [shape = 's32[2]{0}', space=sflag, size = 0x8, scoped, tag = 'scoped memory for tpu_custom_call.1']
    #allocation5 [shape = 'u8[2048]{0}', space=vmem, size = 0x800, scoped, tag = 'input window, operand 1']
    #allocation6 [shape = 's32[2]{0}', space=sflag, size = 0x8, scoped, tag = 'scoped memory for tpu_custom_call.1']
    #allocation7 [shape = 'u8[2048]{0}', space=vmem, size = 0x800, scoped, tag = 'output window, operand 0']
    #allocation8 [shape = 'u8[2048]{0}', space=vmem, size = 0x800, scoped, tag = 'output window, operand 1']
    #allocation9 [shape = 's32[2]{0}', space=sflag, size = 0x8, scoped, tag = 'scoped memory for tpu_custom_call.1']
    %9 = vsyncpa [#allocation3], 0
    %s10 = scalar_lea.sflag [#allocation3], 1
    %11 = vsyncpa %s10, 0
    %12 = vsyncpa [#allocation6], 0
    %s13 = scalar_lea.sflag [#allocation6], 1
    %14 = vsyncpa %s13, 0
    %15 = vsyncpa [#allocation4], 0
    %s16 = scalar_lea.sflag [#allocation4], 1
    %17 = vsyncpa %s16, 0
    %18 = vsyncpa [#allocation9], 0
    %s19 = scalar_lea.sflag [#allocation9], 1
    %20 = vsyncpa %s19, 0
    loop: start=0, step=1, limit=4
    $region2: #{tpu_custom_call.1} parent=1 // loop_pre_header
      _
    $region3: #{tpu_custom_call.1} parent=1 // loop_header
      %s22 = sphi 0, %s26
      %p23 = scmp.ge.s32.totalorder %s22, 4
      %s29 = sphi 0, %s41
      %s30 = sphi 0, %s37
      %s31 = sphi 0, %s29
      %s32 = sphi 0, %s30
      %s33 = sphi 0, %s31
      %s34 = sphi 0, %s32
      %s46 = sphi 0, %s48
      %s49 = sphi 0, %s46
      %s50 = sphi 0, %s49
      %s66 = sphi 0, %s50
      %s74 = sphi 0, %s76
      %s77 = sphi 0, %s74
      %s78 = sphi 0, %s77
      %s94 = sphi 0, %s78
      %s100 = sphi 0, %s102
      %s103 = sphi 0, %s100
      %s104 = sphi 0, %s103
      %s120 = sphi 0, %s104
      %s126 = sphi 0, %s128
      %s129 = sphi 0, %s126
      %s130 = sphi 0, %s129
      %s146 = sphi 0, %s130
    $region4: #{tpu_custom_call.1} parent=1 // loop_header_branch
      %25 = sbr.rel (%p23) target = $region8
    $region5: #{tpu_custom_call.1} parent=1 // loop_body
      %s27 = ssub.s32 %s22, 1
      %s28 = ssub.s32 %s22, 2
      %s35 = sadd.s32 1, %s30
      %p36 = scmp.ge.s32.totalorder %s35, 1
      %s37 = scalar_select %p36, 0, %s35
      %s38 = sadd.s32 1, %s29
      %s39 = scalar_select %p36, %s38, %s29
      %p40 = scmp.ge.s32.totalorder %s39, 2
      %s41 = scalar_select %p40, 0, %s39
      %s42 = ssub.s32 %s29, %s41
      %s43 = ssub.s32 %s30, %s37
      %s44 = sor.u32 %s42, %s43
      %p45 = scmp.eq.s32.totalorder %s44, 0
      %s47 = sadd.s32 %s46, 1
      %s48 = scalar_select %p45, %s46, %s47
      %p51 = pneg %p45
      %p52 = scmp.eq.s32.totalorder %s22, 1
      %p53 = por %p51, %p52
      %p54 = scmp.ne.s32.totalorder %s46, %s49
      %p55 = scmp.eq.s32.totalorder %s22, 0
      %p56 = por %p54, %p55
      %p57 = scmp.ne.s32.totalorder %s46, %s49
      %p58 = scmp.eq.s32.totalorder %s27, 1
      %p59 = por %p57, %p58
      %p60 = scmp.ne.s32.totalorder %s49, %s50
      %p61 = scmp.eq.s32.totalorder %s27, 0
      %p62 = por %p60, %p61
      %p63 = scmp.ne.s32.totalorder %s49, %s50
      %p64 = scmp.eq.s32.totalorder %s28, 1
      %p65 = por %p63, %p64
      %p67 = scmp.ne.s32.totalorder %s50, %s66
      %p68 = scmp.eq.s32.totalorder %s28, 0
      %p69 = por %p67, %p68
      %s70 = ssub.s32 %s29, %s41
      %s71 = ssub.s32 %s30, %s37
      %s72 = sor.u32 %s70, %s71
      %p73 = scmp.eq.s32.totalorder %s72, 0
      %s75 = sadd.s32 %s74, 1
      %s76 = scalar_select %p73, %s74, %s75
      %p79 = pneg %p73
      %p80 = scmp.eq.s32.totalorder %s22, 1
      %p81 = por %p79, %p80
      %p82 = scmp.ne.s32.totalorder %s74, %s77
      %p83 = scmp.eq.s32.totalorder %s22, 0
      %p84 = por %p82, %p83
      %p85 = scmp.ne.s32.totalorder %s74, %s77
      %p86 = scmp.eq.s32.totalorder %s27, 1
      %p87 = por %p85, %p86
      %p88 = scmp.ne.s32.totalorder %s77, %s78
      %p89 = scmp.eq.s32.totalorder %s27, 0
      %p90 = por %p88, %p89
      %p91 = scmp.ne.s32.totalorder %s77, %s78
      %p92 = scmp.eq.s32.totalorder %s28, 1
      %p93 = por %p91, %p92
      %p95 = scmp.ne.s32.totalorder %s78, %s94
      %p96 = scmp.eq.s32.totalorder %s28, 0
      %p97 = por %p95, %p96
      %s98 = ssub.s32 %s29, %s41
      %p99 = scmp.eq.s32.totalorder %s98, 0
      %s101 = sadd.s32 %s100, 1
      %s102 = scalar_select %p99, %s100, %s101
      %p105 = pneg %p99
      %p106 = scmp.eq.s32.totalorder %s22, 1
      %p107 = por %p105, %p106
      %p108 = scmp.ne.s32.totalorder %s100, %s103
      %p109 = scmp.eq.s32.totalorder %s22, 0
      %p110 = por %p108, %p109
      %p111 = scmp.ne.s32.totalorder %s100, %s103
      %p112 = scmp.eq.s32.totalorder %s27, 1
      %p113 = por %p111, %p112
      %p114 = scmp.ne.s32.totalorder %s103, %s104
      %p115 = scmp.eq.s32.totalorder %s27, 0
      %p116 = por %p114, %p115
      %p117 = scmp.ne.s32.totalorder %s103, %s104
      %p118 = scmp.eq.s32.totalorder %s28, 1
      %p119 = por %p117, %p118
      %p121 = scmp.ne.s32.totalorder %s104, %s120
      %p122 = scmp.eq.s32.totalorder %s28, 0
      %p123 = por %p121, %p122
      %s124 = ssub.s32 %s29, %s41
      %p125 = scmp.eq.s32.totalorder %s124, 0
      %s127 = sadd.s32 %s126, 1
      %s128 = scalar_select %p125, %s126, %s127
      %p131 = pneg %p125
      %p132 = scmp.eq.s32.totalorder %s22, 1
      %p133 = por %p131, %p132
      %p134 = scmp.ne.s32.totalorder %s126, %s129
      %p135 = scmp.eq.s32.totalorder %s22, 0
      %p136 = por %p134, %p135
      %p137 = scmp.ne.s32.totalorder %s126, %s129
      %p138 = scmp.eq.s32.totalorder %s27, 1
      %p139 = por %p137, %p138
      %p140 = scmp.ne.s32.totalorder %s129, %s130
      %p141 = scmp.eq.s32.totalorder %s27, 0
      %p142 = por %p140, %p141
      %p143 = scmp.ne.s32.totalorder %s129, %s130
      %p144 = scmp.eq.s32.totalorder %s28, 1
      %p145 = por %p143, %p144
      %p147 = scmp.ne.s32.totalorder %s130, %s146
      %p148 = scmp.eq.s32.totalorder %s28, 0
      %p149 = por %p147, %p148
      %p150 = scmp.le.s32.totalorder 1, %s22
      %p151 = scmp.lt.s32.totalorder %s22, 3
      %p152 = pnand %p150, %p151
      %p153 = pneg %p152
      // Predicated region
      $region9: #{tpu_custom_call.1} parent=5 // pred_check
        _
      $region10: #{tpu_custom_call.1} parent=5 // pred_check_branch
        %155 = sbr.rel (%p152) target = $region12
      $region11: #{tpu_custom_call.1} parent=5 // pred_region
        %s156 = ssub.s32 %s22, 1
      $region12: #{tpu_custom_call.1} parent=5 // pred_fallthru
        _
      %p157 = scmp.lt.s32.totalorder %s22, 2
      // Predicated region
      $region13: #{tpu_custom_call.1} parent=5 // pred_check
        %p158 = pneg %p157
      $region14: #{tpu_custom_call.1} parent=5 // pred_check_branch
        %160 = sbr.rel (%p158) target = $region16
      $region15: #{tpu_custom_call.1} parent=5 // pred_region
        // Predicated region
        $region17: #{tpu_custom_call.1} parent=15 // pred_check
          %p161 = pneg %p56
        $region18: #{tpu_custom_call.1} parent=15 // pred_check_branch
          %163 = sbr.rel (%p161) target = $region20
        $region19: #{tpu_custom_call.1} parent=15 // pred_region
          %s164 = sand.u32 %s46, 1
          %s165 = scalar_lea.sflag [#allocation3], %s164
          %s166 = sand.u32 %s46, 1
          %s167 = smul.addr %s166, 8
          %s168 = scalar_lea.vmem [#allocation2], %s167
          %s169 = smul.u32 2, %s30
          %s171 = ssub.s32 128, 128
          %172 = vsyncadd %s165, %s171
          %s173 = smul.addr %s29, 2
          %s174 = sadd.s32 %s169, %s173
          %s175 = smul.addr %s174, 64
          %s176 = scalar_lea.hbm %s0, %s175
          %s178 = sshll.u32 %s168, 4
          %s179 = int_to_ptr.vmem [resolvable:$true] %s178
          %181 = dma.hbm_to_vmem [thread:$0]  %s176, 128, %s179, %s165
        $region20: #{tpu_custom_call.1} parent=15 // pred_fallthru
          _
        // Predicated region
        $region21: #{tpu_custom_call.1} parent=15 // pred_check
          %p182 = pneg %p84
        $region22: #{tpu_custom_call.1} parent=15 // pred_check_branch
          %184 = sbr.rel (%p182) target = $region24
        $region23: #{tpu_custom_call.1} parent=15 // pred_region
          %s185 = sand.u32 %s74, 1
          %s186 = scalar_lea.sflag [#allocation6], %s185
          %s187 = sand.u32 %s74, 1
          %s188 = smul.addr %s187, 2
          %s189 = scalar_lea.vmem [#allocation5], %s188
          %s190 = smul.u32 2, %s30
          %s192 = ssub.s32 32, 32
          %193 = vsyncadd %s186, %s192
          %s194 = smul.addr %s29, 2
          %s195 = sadd.s32 %s190, %s194
          %s196 = smul.addr %s195, 16
          %s197 = scalar_lea.hbm %s1, %s196
          %s199 = sshll.u32 %s189, 4
          %s200 = int_to_ptr.vmem [resolvable:$true] %s199
          %202 = dma.hbm_to_vmem [thread:$0]  %s197, 32, %s200, %s186
        $region24: #{tpu_custom_call.1} parent=15 // pred_fallthru
          _
      $region16: #{tpu_custom_call.1} parent=5 // pred_fallthru
        _
      %p203 = scmp.le.s32.totalorder 1, %s22
      %p204 = scmp.lt.s32.totalorder %s22, 3
      %p205 = pnand %p203, %p204
      %p206 = pneg %p205
      // Predicated region
      $region25: #{tpu_custom_call.1} parent=5 // pred_check
        _
      $region26: #{tpu_custom_call.1} parent=5 // pred_check_branch
        %208 = sbr.rel (%p205) target = $region28
      $region27: #{tpu_custom_call.1} parent=5 // pred_region
        %s209 = ssub.s32 %s22, 1
        %s210 = sand.u32 %s49, 1
        %s211 = scalar_lea.sflag [#allocation3], %s210
        %s212 = sand.u32 %s49, 1
        %s213 = smul.addr %s212, 8
        %s214 = scalar_lea.vmem [#allocation2], %s213
        // Predicated region
        $region29: #{tpu_custom_call.1} parent=27 // pred_check
          %p215 = pneg %p62
        $region30: #{tpu_custom_call.1} parent=27 // pred_check_branch
          %217 = sbr.rel (%p215) target = $region32
        $region31: #{tpu_custom_call.1} parent=27 // pred_region
          %218 = dma.done %s211, 128
        $region32: #{tpu_custom_call.1} parent=27 // pred_fallthru
          _
        %s219 = sand.u32 %s77, 1
        %s220 = scalar_lea.sflag [#allocation6], %s219
        %s221 = sand.u32 %s77, 1
        %s222 = smul.addr %s221, 2
        %s223 = scalar_lea.vmem [#allocation5], %s222
        // Predicated region
        $region33: #{tpu_custom_call.1} parent=27 // pred_check
          %p224 = pneg %p90
        $region34: #{tpu_custom_call.1} parent=27 // pred_check_branch
          %226 = sbr.rel (%p224) target = $region36
        $region35: #{tpu_custom_call.1} parent=27 // pred_region
          %227 = dma.done %s220, 32
        $region36: #{tpu_custom_call.1} parent=27 // pred_fallthru
          _
        %s228 = sand.u32 %s49, 1
        %s229 = scalar_lea.sflag [#allocation3], %s228
        %s230 = sand.u32 %s49, 1
        %s231 = smul.addr %s230, 8
        %s232 = scalar_lea.vmem [#allocation2], %s231
        %p233 = pneg %p62
        %p234 = pneg %p59
        %s235 = sand.u32 %s77, 1
        %s236 = scalar_lea.sflag [#allocation6], %s235
        %s237 = sand.u32 %s77, 1
        %s238 = smul.addr %s237, 2
        %s239 = scalar_lea.vmem [#allocation5], %s238
        %p240 = pneg %p90
        %p241 = pneg %p87
        %p242 = pneg %p116
        %p243 = pneg %p113
        %s244 = sand.u32 %s103, 1
        %s245 = scalar_lea.sflag [#allocation4], %s244
        %s246 = sand.u32 %s103, 1
        %s247 = smul.addr %s246, 2
        %s248 = scalar_lea.vmem [#allocation7], %s247
        %p249 = pneg %p142
        %p250 = pneg %p139
        %s251 = sand.u32 %s129, 1
        %s252 = scalar_lea.sflag [#allocation9], %s251
        %s253 = sand.u32 %s129, 1
        %s254 = smul.addr %s253, 2
        %s255 = scalar_lea.vmem [#allocation8], %s254
        %s256 = smul.u32 2, %s32
        %s257 = smul.u32 2, %s32
        %p258 = scmp.eq.s32.totalorder %s32, 0
        // Predicated region
        $region37: #{tpu_custom_call.1} parent=27 // pred_check
          %p259 = pneg %p258
        $region38: #{tpu_custom_call.1} parent=27 // pred_check_branch
          %261 = sbr.rel (%p259) target = $region40
        $region39: #{tpu_custom_call.1} parent=27 // pred_region
          %v262 = vlaneseq
          %vm263 = vcmp.ge.s32.totalorder %v262, 0
          %vm264 = vcmp.lt.s32.totalorder %v262, 256
          %vm265 = vmand %vm263, %vm264
          %266 = vst.msk [vmem:[%s248] sm:$0x3] %vm265, 0.0
          %267 = vst.msk [vmem:[%s255] sm:$0x3] %vm265, 0.0
        $region40: #{tpu_custom_call.1} parent=27 // pred_fallthru
          _
        %v268 = vld [vmem:[%s214] sm:$0xff]
        %v269 = vld [vmem:[%s223] sm:$0x3]
        %v271 = vcombine.high %v268, %v268
        %vm273 = vcmask 1043456
        %v274 = vsel %vm273, %v268, -inf
        %v275 = vrot.slane %v274, 4
        %v276 = vmax.f32 %v274, %v275
        %v277 = vrot.slane %v276, 2
        %v278 = vmax.f32 %v276, %v277
        %v279 = vrot.slane %v278, 1
        %v280 = vmax.f32 %v278, %v279
        %v281 = vsel %vm273, %v271, -inf
        %v282 = vrot.slane %v281, 4
        %v283 = vmax.f32 %v281, %v282
        %v284 = vrot.slane %v283, 2
        %v285 = vmax.f32 %v283, %v284
        %v286 = vrot.slane %v285, 1
        %v287 = vmax.f32 %v285, %v286
        %v290 = vcombine.low %v280, %v287
        %v292 = vsub.f32 %v268, %v290
        %v293 = vmul.f32 %v292, 1.442695
        %v294 = vpow.pop %v293
        %v296 = vcombine.high %v294, %v294
        %v298 = vsel %vm273, %v294, 0.0
        %v299 = vrot.slane %v298, 4
        %v300 = vadd.f32 %v298, %v299
        %v301 = vrot.slane %v300, 2
        %v302 = vadd.f32 %v300, %v301
        %v303 = vrot.slane %v302, 1
        %v304 = vadd.f32 %v302, %v303
        %v305 = vsel %vm273, %v296, 0.0
        %v306 = vrot.slane %v305, 4
        %v307 = vadd.f32 %v305, %v306
        %v308 = vrot.slane %v307, 2
        %v309 = vadd.f32 %v307, %v308
        %v310 = vrot.slane %v309, 1
        %v311 = vadd.f32 %v309, %v310
        %v312 = vlog2.pop %v304
        %v313 = vmul.f32 %v312, 0.6931472
        %v314 = vlog2.pop %v311
        %v315 = vmul.f32 %v314, 0.6931472
        %v316 = vadd.f32 %v280, %v313
        %v317 = vadd.f32 %v287, %v315
        %v318 = vlaneseq
        %v319 = vshrl.u32 %v318, 7
        %v320 = vlaneseq
        %v321 = vshrl.u32 %v320, 7
        %v322 = vsub.s32 0, %v321
        %v323 = vrot.slane %v269, %v322
        %v324 = vlaneseq
        %v325 = vshrl.u32 %v324, 7
        %v326 = vsub.s32 1, %v325
        %v327 = vrot.slane %v269, %v326
        %vm328 = vcmp.eq.s32.totalorder %v319, %v323
        %vm329 = vcmp.eq.s32.totalorder %v319, %v327
        %v330 = vsel %vm328, %v268, 0.0
        %v331 = vsel %vm329, %v271, 0.0
        %v332 = vsel %vm273, %v330, 0.0
        %v333 = vrot.slane %v332, 4
        %v334 = vadd.f32 %v332, %v333
        %v335 = vrot.slane %v334, 2
        %v336 = vadd.f32 %v334, %v335
        %v337 = vrot.slane %v336, 1
        %v338 = vadd.f32 %v336, %v337
        %v339 = vsel %vm273, %v331, 0.0
        %v340 = vrot.slane %v339, 4
        %v341 = vadd.f32 %v339, %v340
        %v342 = vrot.slane %v341, 2
        %v343 = vadd.f32 %v341, %v342
        %v344 = vrot.slane %v343, 1
        %v345 = vadd.f32 %v343, %v344
        %v346 = vsub.f32 %v316, %v338
        %v347 = vsub.f32 %v317, %v345
        %vm348 = vcmp.ne.s32.totalorder %v269, 4
        %v349 = vld [vmem:[%s248] sm:$0x3]
        %v352 = vcombine.low %v346, %v347
        %v354 = vunpack.c.l.s4 1966171168
        %v355 = vunpack.c.0.s8 %v354
        %v356 = vlaneseq
        %v357 = vshrl.u32 %v356, 7
        %v358 = vsub.s32 %v355, %v357
        %v359 = vrot.slane %v352, %v358
        %v361 = vunpack.c.l.s4 1966171168
        %v362 = vunpack.c.0.s8 %v361
        %v363 = vlaneseq
        %v364 = vshrl.u32 %v363, 7
        %v365 = vsub.s32 %v362, %v364
        %v366 = vrot.slane %v359, %v365
        %v368 = vsel %vm348, %v366, 0.0
        %v369 = vadd.f32 %v349, %v368
        %v370 = vlaneseq
        %vm371 = vcmp.ge.s32.totalorder %v370, 0
        %vm372 = vcmp.lt.s32.totalorder %v370, 256
        %vm373 = vmand %vm371, %vm372
        %374 = vst.msk [vmem:[%s248] sm:$0x3] %vm373, %v369
        %v375 = vld [vmem:[%s255] sm:$0x3]
        %v376 = vsel %vm348, 1, 0
        %v377 = vcvt.s32.f32 %v376
        %v378 = vadd.f32 %v375, %v377
        %379 = vst.msk [vmem:[%s255] sm:$0x3] %vm373, %v378
        %s380 = sand.u32 %s103, 1
        %s381 = scalar_lea.sflag [#allocation4], %s380
        %s382 = sand.u32 %s103, 1
        %s383 = smul.addr %s382, 2
        %s384 = scalar_lea.vmem [#allocation7], %s383
        %s385 = sand.u32 %s129, 1
        %s386 = scalar_lea.sflag [#allocation9], %s385
        %s387 = sand.u32 %s129, 1
        %s388 = smul.addr %s387, 2
        %s389 = scalar_lea.vmem [#allocation8], %s388
        // Predicated region
        $region41: #{tpu_custom_call.1} parent=27 // pred_check
          %p390 = pneg %p113
        $region42: #{tpu_custom_call.1} parent=27 // pred_check_branch
          %392 = sbr.rel (%p390) target = $region44
        $region43: #{tpu_custom_call.1} parent=27 // pred_region
          %s394 = ssub.s32 32, 32
          %395 = vsyncadd %s381, %s394
          %s396 = smul.addr %s31, 2
          %s397 = smul.addr %s396, 16
          %s398 = scalar_lea.hbm %s2, %s397
          %s400 = sshll.u32 %s384, 4
          %s401 = int_to_ptr.vmem [resolvable:$true] %s400
          %403 = dma.vmem_to_hbm [thread:$0]  %s401, 32, %s398, %s381
        $region44: #{tpu_custom_call.1} parent=27 // pred_fallthru
          _
        // Predicated region
        $region45: #{tpu_custom_call.1} parent=27 // pred_check
          %p404 = pneg %p139
        $region46: #{tpu_custom_call.1} parent=27 // pred_check_branch
          %406 = sbr.rel (%p404) target = $region48
        $region47: #{tpu_custom_call.1} parent=27 // pred_region
          %s408 = ssub.s32 32, 32
          %409 = vsyncadd %s386, %s408
          %s410 = smul.addr %s31, 2
          %s411 = smul.addr %s410, 16
          %s412 = scalar_lea.hbm %s3, %s411
          %s414 = sshll.u32 %s389, 4
          %s415 = int_to_ptr.vmem [resolvable:$true] %s414
          %417 = dma.vmem_to_hbm [thread:$0]  %s415, 32, %s412, %s386
        $region48: #{tpu_custom_call.1} parent=27 // pred_fallthru
          _
      $region28: #{tpu_custom_call.1} parent=5 // pred_fallthru
        _
      %p418 = scmp.le.s32.totalorder 2, %s22
      // Predicated region
      $region49: #{tpu_custom_call.1} parent=5 // pred_check
        %p419 = pneg %p418
      $region50: #{tpu_custom_call.1} parent=5 // pred_check_branch
        %421 = sbr.rel (%p419) target = $region52
      $region51: #{tpu_custom_call.1} parent=5 // pred_region
        %s422 = ssub.s32 %s22, 2
        // Predicated region
        $region53: #{tpu_custom_call.1} parent=51 // pred_check
          %p423 = pneg %p119
        $region54: #{tpu_custom_call.1} parent=51 // pred_check_branch
          %425 = sbr.rel (%p423) target = $region56
        $region55: #{tpu_custom_call.1} parent=51 // pred_region
          %s426 = sand.u32 %s104, 1
          %s427 = scalar_lea.sflag [#allocation4], %s426
          %s428 = sand.u32 %s104, 1
          %s429 = smul.addr %s428, 2
          %s430 = scalar_lea.vmem [#allocation7], %s429
          %431 = dma.done %s427, 32
        $region56: #{tpu_custom_call.1} parent=51 // pred_fallthru
          _
        // Predicated region
        $region57: #{tpu_custom_call.1} parent=51 // pred_check
          %p432 = pneg %p145
        $region58: #{tpu_custom_call.1} parent=51 // pred_check_branch
          %434 = sbr.rel (%p432) target = $region60
        $region59: #{tpu_custom_call.1} parent=51 // pred_region
          %s435 = sand.u32 %s130, 1
          %s436 = scalar_lea.sflag [#allocation9], %s435
          %s437 = sand.u32 %s130, 1
          %s438 = smul.addr %s437, 2
          %s439 = scalar_lea.vmem [#allocation8], %s438
          %440 = dma.done %s436, 32
        $region60: #{tpu_custom_call.1} parent=51 // pred_fallthru
          _
      $region52: #{tpu_custom_call.1} parent=5 // pred_fallthru
        _
    $region6: #{tpu_custom_call.1} parent=1 // loop_footer
      %s26 = sadd.s32 1, %s22
    $region7: #{tpu_custom_call.1} parent=1 // loop_footer_branch
      %21 = sbr.rel target = $region3
    $region8: #{tpu_custom_call.1} parent=1 // loop_exit
      _
    %441 = vsyncpa [#allocation3], 1
    %s442 = scalar_lea.sflag [#allocation3], 1
    %443 = vsyncpa %s442, 1
    %444 = vsyncpa [#allocation6], 1
    %s445 = scalar_lea.sflag [#allocation6], 1
    %446 = vsyncpa %s445, 1
    %447 = vsyncpa [#allocation4], 1
    %s448 = scalar_lea.sflag [#allocation4], 1
    %449 = vsyncpa %s448, 1
    %450 = vsyncpa [#allocation9], 1
    %s451 = scalar_lea.sflag [#allocation9], 1
    %452 = vsyncpa %s451, 1

</llo_original>
